<compile_context>
chip_gen: v7x
topology: tpu7x:2x2x1
jax: 0.10.0
libtpu: 0.0.40
codegen_flags: <defaults>
</compile_context>

<pallas_src>
import functools

import jax
import jax.numpy as jnp
from jax.experimental import pallas as pl
from jax.experimental.pallas import tpu as pltpu


def _encoder_kernel(y_ref, c_ref, w1y_ref, w1c_ref, b1_ref,
                    w2m_ref, w2s_ref, b2m_ref, b2s_ref,
                    mu_ref, sigma_ref):
    # y: (tB, y_dim), c: (tB, c_dim), w1y: (y_dim, H), w1c: (c_dim, H),
    # b1: (1, H), w2m/w2s: (H, z), b2m/b2s: (1, z), mu/sigma: (tB, z)
    wdt = w1y_ref.dtype  # MXU input dtype (f32 or bf16)

    # Fused-concat first layer: x @ w1 == Y @ w1[:y_dim] + c @ w1[y_dim:]
    h = (jnp.dot(y_ref[...], w1y_ref[...], preferred_element_type=jnp.float32)
         + jnp.dot(c_ref[...], w1c_ref[...], preferred_element_type=jnp.float32)
         + b1_ref[...].astype(jnp.float32))
    h = jnp.maximum(h, 0.0)          # ReLU (f32 on the VPU)
    h = h.astype(wdt)                # back to MXU input dtype

    mu = (jnp.dot(h, w2m_ref[...], preferred_element_type=jnp.float32)
          + b2m_ref[...].astype(jnp.float32))
    s = (jnp.dot(h, w2s_ref[...], preferred_element_type=jnp.float32)
         + b2s_ref[...].astype(jnp.float32))

    # Stable softplus: max(x,0) + log1p(exp(-|x|)); exp/log1p run on the EUP.
    sp = jnp.maximum(s, 0.0) + jnp.log1p(jnp.exp(-jnp.abs(s)))

    mu_ref[...] = mu.astype(mu_ref.dtype)
    sigma_ref[...] = (1e-6 + sp).astype(sigma_ref.dtype)


def _round_up(x, m):
    return ((x + m - 1) // m) * m


def _cdiv(a, b):
    return -(-a // b)


@functools.partial(
    jax.jit,
    static_argnames=("z_dim", "tile_b", "compute_dtype", "out_dtype"))
def c_encoder_forward(Y, c, params, z_dim, *, tile_b=4096,
                      compute_dtype=jnp.float32, out_dtype=jnp.float32):
    """Pallas implementation of cEncoder.forward(Y, c) -> (mu, sigma)."""
    w1, b1, w2, b2 = params
    B, y_dim = Y.shape
    c_dim = c.shape[1]
    H = w1.shape[1]
    two_z = w2.shape[1]
    assert two_z == 2 * z_dim
    assert w1.shape[0] == y_dim + c_dim

    # bf16 at the boundary (when requested): cast activations + weights in the
    # wrapper so the kernel streams the narrow dtype through HBM.  (Callers
    # that reuse weights should cache the bf16 copies.)
    Yk = Y.astype(compute_dtype)
    ck = c.astype(compute_dtype)
    w1y = w1[:y_dim].astype(compute_dtype)
    w1c = w1[y_dim:].astype(compute_dtype)
    w2m = w2[:, :z_dim].astype(compute_dtype)
    w2s = w2[:, z_dim:two_z].astype(compute_dtype)
    b1r = b1.reshape(1, H).astype(jnp.float32)
    b2r = b2.reshape(1, two_z).astype(jnp.float32)
    b2m = b2r[:, :z_dim]
    b2s = b2r[:, z_dim:two_z]

    # Batch tiling.  No input padding: the last block may be ragged and Pallas
    # masks it (OOB reads padded, OOB writes dropped).
    tile_b = max(8, _round_up(tile_b, 8))
    if B < 8:
        tile = B                                   # block == full array
    else:
        tile = min(tile_b, _round_up(B, 8))
        tile = _round_up(tile, 8)
    grid_n = _cdiv(B, tile)
    # v7x megacore: prefer an even grid (>1) so both TensorCores get work.
    if grid_n > 1 and grid_n % 2 == 1:
        tile = _round_up(_cdiv(B, grid_n + 1), 8)
        grid_n = _cdiv(B, tile)

    # Weights/biases use constant block indices -> stay resident in VMEM
    # across the batch grid (no per-step weight DMAs).
    in_specs = [
        pl.BlockSpec((tile, y_dim), lambda i: (i, 0)),   # Y tile
        pl.BlockSpec((tile, c_dim), lambda i: (i, 0)),   # c tile
        pl.BlockSpec((y_dim, H), lambda i: (0, 0)),      # w1_y (resident)
        pl.BlockSpec((c_dim, H), lambda i: (0, 0)),      # w1_c (resident)
        pl.BlockSpec((1, H), lambda i: (0, 0)),          # b1   (resident)
        pl.BlockSpec((H, z_dim), lambda i: (0, 0)),      # w2_mu (resident)
        pl.BlockSpec((H, z_dim), lambda i: (0, 0)),      # w2_sig (resident)
        pl.BlockSpec((1, z_dim), lambda i: (0, 0)),      # b2_mu (resident)
        pl.BlockSpec((1, z_dim), lambda i: (0, 0)),      # b2_sig (resident)
    ]
    out_specs = [
        pl.BlockSpec((tile, z_dim), lambda i: (i, 0)),   # mu
        pl.BlockSpec((tile, z_dim), lambda i: (i, 0)),   # sigma
    ]
    out_shape = (
        jax.ShapeDtypeStruct((B, z_dim), out_dtype),
        jax.ShapeDtypeStruct((B, z_dim), out_dtype),
    )

    mu, sigma = pl.pallas_call(
        _encoder_kernel,
        out_shape=out_shape,
        grid=(grid_n,),
        in_specs=in_specs,
        out_specs=out_specs,
        compiler_params=pltpu.CompilerParams(
            dimension_semantics=("parallel",),      # 2x on v7x's 2 TCs
            vmem_limit_bytes=32 * 1024 * 1024,      # safe on v7x (64 MiB phys)
        ),
    )(Yk, ck, w1y, w1c, b1r, w2m, w2s, b2m, b2s)

    return mu, sigma


def make_params(key, in_dim, hidden, z_dim):
    """Deterministic synthetic parameters for `mapping` (Linear-ReLU-Linear)."""
    k1, k2, k3, k4 = jax.random.split(key, 4)
    w1 = jax.random.normal(k1, (in_dim, hidden), jnp.float32) * 0.1
    b1 = jax.random.normal(k2, (1, hidden), jnp.float32) * 0.05
    w2 = jax.random.normal(k3, (hidden, 2 * z_dim), jnp.float32) * 0.1
    b2 = jax.random.normal(k4, (1, 2 * z_dim), jnp.float32) * 0.05
    return w1, b1, w2, b2


def _reference(Y, c, params, z_dim):
    w1, b1, w2, b2 = params
    x = jnp.concatenate([Y, c], axis=1)
    h = jnp.maximum(x @ w1 + b1, 0.0)
    out = h @ w2 + b2
    mu = out[:, :z_dim]
    sigma = 1e-6 + jax.nn.softplus(out[:, z_dim:2 * z_dim])
    return mu, sigma


if __name__ == "__main__":
    key = jax.random.PRNGKey(0)
    k_y, k_c, k_p, k_y2, k_c2, k_y3, k_c3 = jax.random.split(key, 7)

    y_dim, c_dim = 24, 8
    hidden, z_dim = 64, 16
    in_dim = y_dim + c_dim
    params = make_params(k_p, in_dim, hidden, z_dim)

    # --- small aligned batch (single grid step) ---------------------------
    batch = 8
    Y = jax.random.normal(k_y, (batch, y_dim), jnp.float32)
    cond = jax.random.normal(k_c, (batch, c_dim), jnp.float32)

    mu, sigma = c_encoder_forward(Y, cond, params, z_dim)
    jax.block_until_ready((mu, sigma))
    mu_ref, sigma_ref = _reference(Y, cond, params, z_dim)
    assert mu.shape == (batch, z_dim) and sigma.shape == (batch, z_dim)
    assert jnp.allclose(mu, mu_ref, atol=2e-3, rtol=2e-3)
    assert jnp.allclose(sigma, sigma_ref, atol=2e-3, rtol=2e-3)

    # --- tiny, non-multiple-of-8 batch (full-array block) -----------------
    batch_s = 6
    Ys = jax.random.normal(k_y3, (batch_s, y_dim), jnp.float32)
    cs = jax.random.normal(k_c3, (batch_s, c_dim), jnp.float32)
    mu_s, sigma_s = c_encoder_forward(Ys, cs, params, z_dim)
    jax.block_until_ready((mu_s, sigma_s))
    mu_s_ref, sigma_s_ref = _reference(Ys, cs, params, z_dim)
    assert mu_s.shape == (batch_s, z_dim)
    assert jnp.allclose(mu_s, mu_s_ref, atol=2e-3, rtol=2e-3)
    assert jnp.allclose(sigma_s, sigma_s_ref, atol=2e-3, rtol=2e-3)

    # --- large batch: even multi-step grid + ragged last block (no pad) ---
    batch2 = 5000  # tile_b=2048 -> even grid of 4 tiles of 1256 rows
    Y2 = jax.random.normal(k_y2, (batch2, y_dim), jnp.float32)
    c2 = jax.random.normal(k_c2, (batch2, c_dim), jnp.float32)

    mu2, sigma2 = c_encoder_forward(Y2, c2, params, z_dim, tile_b=2048)
    jax.block_until_ready((mu2, sigma2))
    mu2_ref, sigma2_ref = _reference(Y2, c2, params, z_dim)
    assert mu2.shape == (batch2, z_dim) and sigma2.shape == (batch2, z_dim)
    assert jnp.allclose(mu2, mu2_ref, atol=2e-3, rtol=2e-3)
    assert jnp.allclose(sigma2, sigma2_ref, atol=2e-3, rtol=2e-3)

    # --- bf16-at-the-boundary path (v6e/v7x), f32 accumulation ------------
    mu3, sigma3 = c_encoder_forward(Y2, c2, params, z_dim, tile_b=2048,
                                    compute_dtype=jnp.bfloat16,
                                    out_dtype=jnp.bfloat16)
    jax.block_until_ready((mu3, sigma3))
    assert mu3.dtype == jnp.bfloat16 and sigma3.dtype == jnp.bfloat16
    assert jnp.allclose(mu3.astype(jnp.float32), mu2_ref, atol=5e-2, rtol=5e-2)
    assert jnp.allclose(sigma3.astype(jnp.float32), sigma2_ref,
                        atol=5e-2, rtol=5e-2)

    print("KERNEL_OK")
</pallas_src>

<mosaic_0001>
module attributes {stable_mosaic.version = 11 : i64} {
  func.func @_encoder_kernel(%arg0: i32, %arg1: memref<8x24xf32, #tpu.memory_space<vmem>>, %arg2: memref<8x8xf32, #tpu.memory_space<vmem>>, %arg3: memref<24x64xf32, #tpu.memory_space<vmem>>, %arg4: memref<8x64xf32, #tpu.memory_space<vmem>>, %arg5: memref<1x64xf32, #tpu.memory_space<vmem>>, %arg6: memref<64x16xf32, #tpu.memory_space<vmem>>, %arg7: memref<64x16xf32, #tpu.memory_space<vmem>>, %arg8: memref<1x16xf32, #tpu.memory_space<vmem>>, %arg9: memref<1x16xf32, #tpu.memory_space<vmem>>, %arg10: memref<8x16xf32, #tpu.memory_space<vmem>>, %arg11: memref<8x16xf32, #tpu.memory_space<vmem>>) attributes {dimension_semantics = [#tpu.dimension_semantics<parallel>], iteration_bounds = array<i64: 1>, scalar_prefetch = 0 : i64, scratch_operands = 0 : i64, tpu.core_type = #tpu.core_type<tc>, window_params = [{transform_indices = @transform_0, window_bounds = array<i64: 8, 24>}, {transform_indices = @transform_1, window_bounds = array<i64: 8, 8>}, {pipeline_mode = #tpu.pipeline_mode<synchronous>, transform_indices = @transform_2, window_bounds = array<i64: 24, 64>}, {pipeline_mode = #tpu.pipeline_mode<synchronous>, transform_indices = @transform_3, window_bounds = array<i64: 8, 64>}, {pipeline_mode = #tpu.pipeline_mode<synchronous>, transform_indices = @transform_4, window_bounds = array<i64: 1, 64>}, {pipeline_mode = #tpu.pipeline_mode<synchronous>, transform_indices = @transform_5, window_bounds = array<i64: 64, 16>}, {pipeline_mode = #tpu.pipeline_mode<synchronous>, transform_indices = @transform_6, window_bounds = array<i64: 64, 16>}, {pipeline_mode = #tpu.pipeline_mode<synchronous>, transform_indices = @transform_7, window_bounds = array<i64: 1, 16>}, {pipeline_mode = #tpu.pipeline_mode<synchronous>, transform_indices = @transform_8, window_bounds = array<i64: 1, 16>}, {transform_indices = @transform_9, window_bounds = array<i64: 8, 16>}, {transform_indices = @transform_10, window_bounds = array<i64: 8, 16>}]} {
    %c0 = arith.constant 0 : index
    %c0_0 = arith.constant 0 : index
    %0 = vector.load %arg1[%c0, %c0_0] : memref<8x24xf32, #tpu.memory_space<vmem>>, vector<8x24xf32>
    %c0_1 = arith.constant 0 : index
    %c0_2 = arith.constant 0 : index
    %1 = vector.load %arg3[%c0_1, %c0_2] : memref<24x64xf32, #tpu.memory_space<vmem>>, vector<24x64xf32>
    %cst = arith.constant dense<0.000000e+00> : vector<8x64xf32>
    %2 = tpu.matmul %0, %1, %cst {dimension_numbers = #tpu.dot_dimension_numbers<[1], [0], [0], [1], [0, 0, 1, 1], [], []>} : vector<8x24xf32>, vector<24x64xf32>, vector<8x64xf32> -> vector<8x64xf32>
    %c0_3 = arith.constant 0 : index
    %c0_4 = arith.constant 0 : index
    %3 = vector.load %arg2[%c0_3, %c0_4] : memref<8x8xf32, #tpu.memory_space<vmem>>, vector<8x8xf32>
    %c0_5 = arith.constant 0 : index
    %c0_6 = arith.constant 0 : index
    %4 = vector.load %arg4[%c0_5, %c0_6] : memref<8x64xf32, #tpu.memory_space<vmem>>, vector<8x64xf32>
    %cst_7 = arith.constant dense<0.000000e+00> : vector<8x64xf32>
    %5 = tpu.matmul %3, %4, %cst_7 {dimension_numbers = #tpu.dot_dimension_numbers<[1], [0], [0], [1], [0, 0, 1, 1], [], []>} : vector<8x8xf32>, vector<8x64xf32>, vector<8x64xf32> -> vector<8x64xf32>
    %6 = arith.addf %2, %5 : vector<8x64xf32>
    %c0_8 = arith.constant 0 : index
    %c0_9 = arith.constant 0 : index
    %7 = vector.load %arg5[%c0_8, %c0_9] : memref<1x64xf32, #tpu.memory_space<vmem>>, vector<1x64xf32>
    %8 = vector.broadcast %7 : vector<1x64xf32> to vector<8x64xf32>
    %9 = arith.addf %6, %8 : vector<8x64xf32>
    %cst_10 = arith.constant 0.000000e+00 : f32
    %10 = vector.broadcast %cst_10 : f32 to vector<8x64xf32>
    %11 = arith.maximumf %9, %10 : vector<8x64xf32>
    %c0_11 = arith.constant 0 : index
    %c0_12 = arith.constant 0 : index
    %12 = vector.load %arg6[%c0_11, %c0_12] : memref<64x16xf32, #tpu.memory_space<vmem>>, vector<64x16xf32>
    %cst_13 = arith.constant dense<0.000000e+00> : vector<8x16xf32>
    %13 = tpu.matmul %11, %12, %cst_13 {dimension_numbers = #tpu.dot_dimension_numbers<[1], [0], [0], [1], [0, 0, 1, 1], [], []>} : vector<8x64xf32>, vector<64x16xf32>, vector<8x16xf32> -> vector<8x16xf32>
    %c0_14 = arith.constant 0 : index
    %c0_15 = arith.constant 0 : index
    %14 = vector.load %arg8[%c0_14, %c0_15] : memref<1x16xf32, #tpu.memory_space<vmem>>, vector<1x16xf32>
    %15 = vector.broadcast %14 : vector<1x16xf32> to vector<8x16xf32>
    %16 = arith.addf %13, %15 : vector<8x16xf32>
    %c0_16 = arith.constant 0 : index
    %c0_17 = arith.constant 0 : index
    %17 = vector.load %arg7[%c0_16, %c0_17] : memref<64x16xf32, #tpu.memory_space<vmem>>, vector<64x16xf32>
    %cst_18 = arith.constant dense<0.000000e+00> : vector<8x16xf32>
    %18 = tpu.matmul %11, %17, %cst_18 {dimension_numbers = #tpu.dot_dimension_numbers<[1], [0], [0], [1], [0, 0, 1, 1], [], []>} : vector<8x64xf32>, vector<64x16xf32>, vector<8x16xf32> -> vector<8x16xf32>
    %c0_19 = arith.constant 0 : index
    %c0_20 = arith.constant 0 : index
    %19 = vector.load %arg9[%c0_19, %c0_20] : memref<1x16xf32, #tpu.memory_space<vmem>>, vector<1x16xf32>
    %20 = vector.broadcast %19 : vector<1x16xf32> to vector<8x16xf32>
    %21 = arith.addf %18, %20 : vector<8x16xf32>
    %cst_21 = arith.constant 0.000000e+00 : f32
    %22 = vector.broadcast %cst_21 : f32 to vector<8x16xf32>
    %23 = arith.maximumf %21, %22 : vector<8x16xf32>
    %24 = math.absf %21 : vector<8x16xf32>
    %cst_22 = arith.constant 0.000000e+00 : f32
    %25 = vector.broadcast %cst_22 : f32 to vector<8x16xf32>
    %26 = arith.subf %25, %24 : vector<8x16xf32>
    %27 = math.exp %26 : vector<8x16xf32>
    %28 = math.log1p %27 : vector<8x16xf32>
    %29 = arith.addf %23, %28 : vector<8x16xf32>
    %c0_23 = arith.constant 0 : index
    %c0_24 = arith.constant 0 : index
    %30 = vector.load %arg10[%c0_23, %c0_24] : memref<8x16xf32, #tpu.memory_space<vmem>>, vector<8x16xf32>
    tpu.vector_store %arg10[%c0_23, %c0_24], %16 {strides = array<i32>} : memref<8x16xf32, #tpu.memory_space<vmem>>, vector<8x16xf32>,
    %cst_25 = arith.constant 9.99999997E-7 : f32
    %31 = vector.broadcast %cst_25 : f32 to vector<8x16xf32>
    %32 = arith.addf %31, %29 : vector<8x16xf32>
    %c0_26 = arith.constant 0 : index
    %c0_27 = arith.constant 0 : index
    %33 = vector.load %arg11[%c0_26, %c0_27] : memref<8x16xf32, #tpu.memory_space<vmem>>, vector<8x16xf32>
    tpu.vector_store %arg11[%c0_26, %c0_27], %32 {strides = array<i32>} : memref<8x16xf32, #tpu.memory_space<vmem>>, vector<8x16xf32>,
    return
  }
  func.func @transform_0(%arg0: i32) -> (i32, i32) {
    %c0_i32 = arith.constant 0 : i32
    %c0_i32_0 = arith.constant 0 : i32
    return %arg0, %c0_i32 : i32, i32
  }
  func.func @transform_1(%arg0: i32) -> (i32, i32) {
    %c0_i32 = arith.constant 0 : i32
    %c0_i32_0 = arith.constant 0 : i32
    return %arg0, %c0_i32 : i32, i32
  }
  func.func @transform_2(%arg0: i32) -> (i32, i32) {
    %c0_i32 = arith.constant 0 : i32
    %c0_i32_0 = arith.constant 0 : i32
    %c0_i32_1 = arith.constant 0 : i32
    return %c0_i32, %c0_i32_0 : i32, i32
  }
  func.func @transform_3(%arg0: i32) -> (i32, i32) {
    %c0_i32 = arith.constant 0 : i32
    %c0_i32_0 = arith.constant 0 : i32
    %c0_i32_1 = arith.constant 0 : i32
    return %c0_i32, %c0_i32_0 : i32, i32
  }
  func.func @transform_4(%arg0: i32) -> (i32, i32) {
    %c0_i32 = arith.constant 0 : i32
    %c0_i32_0 = arith.constant 0 : i32
    %c0_i32_1 = arith.constant 0 : i32
    return %c0_i32, %c0_i32_0 : i32, i32
  }
  func.func @transform_5(%arg0: i32) -> (i32, i32) {
    %c0_i32 = arith.constant 0 : i32
    %c0_i32_0 = arith.constant 0 : i32
    %c0_i32_1 = arith.constant 0 : i32
    return %c0_i32, %c0_i32_0 : i32, i32
  }
  func.func @transform_6(%arg0: i32) -> (i32, i32) {
    %c0_i32 = arith.constant 0 : i32
    %c0_i32_0 = arith.constant 0 : i32
    %c0_i32_1 = arith.constant 0 : i32
    return %c0_i32, %c0_i32_0 : i32, i32
  }
  func.func @transform_7(%arg0: i32) -> (i32, i32) {
    %c0_i32 = arith.constant 0 : i32
    %c0_i32_0 = arith.constant 0 : i32
    %c0_i32_1 = arith.constant 0 : i32
    return %c0_i32, %c0_i32_0 : i32, i32
  }
  func.func @transform_8(%arg0: i32) -> (i32, i32) {
    %c0_i32 = arith.constant 0 : i32
    %c0_i32_0 = arith.constant 0 : i32
    %c0_i32_1 = arith.constant 0 : i32
    return %c0_i32, %c0_i32_0 : i32, i32
  }
  func.func @transform_9(%arg0: i32) -> (i32, i32) {
    %c0_i32 = arith.constant 0 : i32
    %c0_i32_0 = arith.constant 0 : i32
    return %arg0, %c0_i32 : i32, i32
  }
  func.func @transform_10(%arg0: i32) -> (i32, i32) {
    %c0_i32 = arith.constant 0 : i32
    %c0_i32_0 = arith.constant 0 : i32
    return %arg0, %c0_i32 : i32, i32
  }
}

</mosaic_0001>

<llo_original>
// kernel: c_encoder_forward.1
$region0: #{c_encoder_forward.1}
  #allocation0 [shape = 'u32[]', space=smem, size = 0x4, offset = 0x4, fixed_abs, tag = 'smem constant byte address 0x4 - core index']
  #allocation1 [shape = 'u32[144,128]{1,0:T(1,128)}', space=vmem, size = 0x12000, scoped, tag = 'internal scratch']
  %s0 = inlined_call_operand.vmem [shape: f32[8,24], index: 0, kind: input, shape index: {}]
  %s1 = inlined_call_operand.vmem [shape: f32[8,8], index: 1, kind: input, shape index: {}]
  %s2 = inlined_call_operand.vmem [shape: f32[24,64], index: 2, kind: input, shape index: {}]
  %s3 = inlined_call_operand.vmem [shape: f32[8,64], index: 3, kind: input, shape index: {}]
  %s4 = inlined_call_operand.vmem [shape: f32[1,64], index: 4, kind: input, shape index: {}]
  %s5 = inlined_call_operand.vmem [shape: f32[64,16], index: 5, kind: input, shape index: {}]
  %s6 = inlined_call_operand.vmem [shape: f32[64,16], index: 6, kind: input, shape index: {}]
  %s7 = inlined_call_operand.vmem [shape: f32[1,16], index: 7, kind: input, shape index: {}]
  %s8 = inlined_call_operand.vmem [shape: f32[1,16], index: 8, kind: input, shape index: {}]
  %s9 = inlined_call_operand.hbm [shape: f32[8,16], index: 9, kind: output, shape index: {0}]
  %s10 = inlined_call_operand.hbm [shape: f32[8,16], index: 10, kind: output, shape index: {1}]
  %11 = xla_tuple %s9, %s10
  %s12 = sld [smem:[#allocation0]]
  $region54: #{c_encoder_forward.1} parent=0
    _
  %s14 = ssub.s32 1, %s12
  %s15 = scalar_select 0, %s14, %s12
  $region1: #{c_encoder_forward.1} parent=0
    #allocation2 [shape = 'u8[4096]{0}', space=vmem, size = 0x1000, scoped, tag = 'output window, operand 0, single buffered']
    #allocation3 [shape = 's32[1]{0}', space=sflag, size = 0x4, scoped, tag = 'scoped memory for c_encoder_forward.1']
    #allocation4 [shape = 'u8[4096]{0}', space=vmem, size = 0x1000, scoped, tag = 'output window, operand 1, single buffered']
    #allocation5 [shape = 's32[1]{0}', space=sflag, size = 0x4, scoped, tag = 'scoped memory for c_encoder_forward.1']
    %16 = vsyncpa [#allocation3], 0
    %17 = vsyncpa [#allocation5], 0
    // Predicated region
    $region2: #{c_encoder_forward.1} parent=1 // pred_check
      _
    $region3: #{c_encoder_forward.1} parent=1 // pred_check_branch
      %19 = sbr.rel (0) target = $region5
    $region4: #{c_encoder_forward.1} parent=1 // pred_region
      _
    $region5: #{c_encoder_forward.1} parent=1 // pred_fallthru
      _
    // Predicated region
    $region6: #{c_encoder_forward.1} parent=1 // pred_check
      _
    $region7: #{c_encoder_forward.1} parent=1 // pred_check_branch
      %21 = sbr.rel (0) target = $region9
    $region8: #{c_encoder_forward.1} parent=1 // pred_region
      _
    $region9: #{c_encoder_forward.1} parent=1 // pred_fallthru
      _
    // Predicated region
    $region10: #{c_encoder_forward.1} parent=1 // pred_check
      _
    $region11: #{c_encoder_forward.1} parent=1 // pred_check_branch
      %23 = sbr.rel (0) target = $region13
    $region12: #{c_encoder_forward.1} parent=1 // pred_region
      _
    $region13: #{c_encoder_forward.1} parent=1 // pred_fallthru
      _
    // Predicated region
    $region14: #{c_encoder_forward.1} parent=1 // pred_check
      _
    $region15: #{c_encoder_forward.1} parent=1 // pred_check_branch
      %25 = sbr.rel (0) target = $region17
    $region16: #{c_encoder_forward.1} parent=1 // pred_region
      _
    $region17: #{c_encoder_forward.1} parent=1 // pred_fallthru
      _
    // Predicated region
    $region18: #{c_encoder_forward.1} parent=1 // pred_check
      _
    $region19: #{c_encoder_forward.1} parent=1 // pred_check_branch
      %27 = sbr.rel (0) target = $region21
    $region20: #{c_encoder_forward.1} parent=1 // pred_region
      _
    $region21: #{c_encoder_forward.1} parent=1 // pred_fallthru
      _
    // Predicated region
    $region22: #{c_encoder_forward.1} parent=1 // pred_check
      _
    $region23: #{c_encoder_forward.1} parent=1 // pred_check_branch
      %29 = sbr.rel (0) target = $region25
    $region24: #{c_encoder_forward.1} parent=1 // pred_region
      _
    $region25: #{c_encoder_forward.1} parent=1 // pred_fallthru
      _
    // Predicated region
    $region26: #{c_encoder_forward.1} parent=1 // pred_check
      _
    $region27: #{c_encoder_forward.1} parent=1 // pred_check_branch
      %31 = sbr.rel (0) target = $region29
    $region28: #{c_encoder_forward.1} parent=1 // pred_region
      _
    $region29: #{c_encoder_forward.1} parent=1 // pred_fallthru
      _
    // Predicated region
    $region30: #{c_encoder_forward.1} parent=1 // pred_check
      _
    $region31: #{c_encoder_forward.1} parent=1 // pred_check_branch
      %33 = sbr.rel (0) target = $region33
    $region32: #{c_encoder_forward.1} parent=1 // pred_region
      _
    $region33: #{c_encoder_forward.1} parent=1 // pred_fallthru
      _
    // Predicated region
    $region34: #{c_encoder_forward.1} parent=1 // pred_check
      _
    $region35: #{c_encoder_forward.1} parent=1 // pred_check_branch
      %35 = sbr.rel (0) target = $region37
    $region36: #{c_encoder_forward.1} parent=1 // pred_region
      _
    $region37: #{c_encoder_forward.1} parent=1 // pred_fallthru
      _
    %v36 = vld [vmem:[%s0] sm:$0xff]
    %v37 = vld [vmem:[%s2] sm:$0xff]
    %v38 = vld [vmem:[%s2 + $0x8] sm:$0xff]
    %v39 = vld [vmem:[%s2 + $0x10] sm:$0xff]
    %v40 = vld [vmem:[%s1] sm:$0xff]
    %v41 = vld [vmem:[%s3] sm:$0xff]
    %vm42 = vcmask 64512
    %v44 = vsel %vm42, %v40, 0
    %46 = vmatprep.subr.mxu0 0.0
    %47 = vmatpush1.msra.mxu0 %v41
    %48 = vmatprep.subr.mxu0 0.0
    %49 = vmatpush1.msra.mxu0 0.0
    %50 = vmatprep.subr.mxu0 0.0
    %51 = vmatpush1.msra.mxu0 0.0
    %52 = vmatprep.subr.mxu0 0.0
    %53 = vmatpush1.msra.mxu0 0.0
    %54 = vmatprep.subr.mxu0 0.0
    %55 = vmatpush1.msra.mxu0 0.0
    %56 = vmatprep.subr.mxu0 0.0
    %57 = vmatpush1.msra.mxu0 0.0
    %58 = vmatprep.subr.mxu0 0.0
    %59 = vmatpush1.msra.mxu0 0.0
    %60 = vmatprep.subr.mxu0 0.0
    %61 = vmatpush1.msra.mxu0 0.0
    %62 = vmatprep.subr.mxu0 0.0
    %63 = vmatpush1.msra.mxu0 0.0
    %64 = vmatprep.subr.mxu0 0.0
    %65 = vmatpush1.msra.mxu0 0.0
    %66 = vmatprep.subr.mxu0 0.0
    %67 = vmatpush1.msra.mxu0 0.0
    %68 = vmatprep.subr.mxu0 0.0
    %69 = vmatpush1.msra.mxu0 0.0
    %70 = vmatprep.subr.mxu0 0.0
    %71 = vmatpush1.msra.mxu0 0.0
    %72 = vmatprep.subr.mxu0 0.0
    %73 = vmatpush1.msra.mxu0 0.0
    %74 = vmatprep.subr.mxu0 0.0
    %75 = vmatpush1.msra.mxu0 0.0
    %76 = vmatprep.subr.mxu0 0.0
    %77 = vmatpush1.msra.mxu0 0.0
    %78 = vmatprep.subr.mxu0 0.0
    %79 = vmatpush1.msra.mxu0 0.0
    %80 = vmatprep.subr.mxu0 0.0
    %81 = vmatpush1.msra.mxu0 0.0
    %82 = vmatprep.subr.mxu0 0.0
    %83 = vmatpush1.msra.mxu0 0.0
    %84 = vmatprep.subr.mxu0 0.0
    %85 = vmatpush1.msra.mxu0 0.0
    %86 = vmatprep.subr.mxu0 0.0
    %87 = vmatpush1.msra.mxu0 0.0
    %88 = vmatprep.subr.mxu0 0.0
    %89 = vmatpush1.msra.mxu0 0.0
    %90 = vmatprep.subr.mxu0 0.0
    %91 = vmatpush1.msra.mxu0 0.0
    %92 = vmatprep.subr.mxu0 0.0
    %93 = vmatpush1.msra.mxu0 0.0
    %94 = vmatprep.subr.mxu0 0.0
    %95 = vmatpush1.msra.mxu0 0.0
    %96 = vmatprep.subr.mxu0 0.0
    %97 = vmatpush1.msra.mxu0 0.0
    %98 = vmatprep.subr.mxu0 0.0
    %99 = vmatpush1.msra.mxu0 0.0
    %100 = vmatprep.subr.mxu0 0.0
    %101 = vmatpush1.msra.mxu0 0.0
    %102 = vmatprep.subr.mxu0 0.0
    %103 = vmatpush1.msra.mxu0 0.0
    %104 = vmatprep.subr.mxu0 0.0
    %105 = vmatpush1.msra.mxu0 0.0
    %106 = vmatprep.subr.mxu0 0.0
    %107 = vmatpush1.msra.mxu0 0.0
    %108 = vmatprep.subr.mxu0 0.0
    %109 = vmatpush1.msra.mxu0 0.0
    %110 = vmatprep.mubr.f32.mxu0 0.0
    %111 = vmatmul.mubr.f32.gmra.mrb[0].mxu0 %v44
    %v112 = vpop.f32.mrb[0].mxu0
    %v113 = vadd.f32 0.0, %v112
    %v114 = vpop.f32.mrb[0].mxu0
    %115 = vdwg.mxu0
    %vm116 = vcmask 195584
    %v118 = vsel %vm116, %v36, 0
    %120 = vmatprep.subr.mxu0 0.0
    %121 = vmatpush1.msra.mxu0 %v37
    %122 = vmatprep.subr.mxu0 0.0
    %123 = vmatpush1.msra.mxu0 %v38
    %124 = vmatprep.subr.mxu0 0.0
    %125 = vmatpush1.msra.mxu0 %v39
    %126 = vmatprep.subr.mxu0 0.0
    %127 = vmatpush1.msra.mxu0 0.0
    %128 = vmatprep.subr.mxu0 0.0
    %129 = vmatpush1.msra.mxu0 0.0
    %130 = vmatprep.subr.mxu0 0.0
    %131 = vmatpush1.msra.mxu0 0.0
    %132 = vmatprep.subr.mxu0 0.0
    %133 = vmatpush1.msra.mxu0 0.0
    %134 = vmatprep.subr.mxu0 0.0
    %135 = vmatpush1.msra.mxu0 0.0
    %136 = vmatprep.subr.mxu0 0.0
    %137 = vmatpush1.msra.mxu0 0.0
    %138 = vmatprep.subr.mxu0 0.0
    %139 = vmatpush1.msra.mxu0 0.0
    %140 = vmatprep.subr.mxu0 0.0
    %141 = vmatpush1.msra.mxu0 0.0
    %142 = vmatprep.subr.mxu0 0.0
    %143 = vmatpush1.msra.mxu0 0.0
    %144 = vmatprep.subr.mxu0 0.0
    %145 = vmatpush1.msra.mxu0 0.0
    %146 = vmatprep.subr.mxu0 0.0
    %147 = vmatpush1.msra.mxu0 0.0
    %148 = vmatprep.subr.mxu0 0.0
    %149 = vmatpush1.msra.mxu0 0.0
    %150 = vmatprep.subr.mxu0 0.0
    %151 = vmatpush1.msra.mxu0 0.0
    %152 = vmatprep.subr.mxu0 0.0
    %153 = vmatpush1.msra.mxu0 0.0
    %154 = vmatprep.subr.mxu0 0.0
    %155 = vmatpush1.msra.mxu0 0.0
    %156 = vmatprep.subr.mxu0 0.0
    %157 = vmatpush1.msra.mxu0 0.0
    %158 = vmatprep.subr.mxu0 0.0
    %159 = vmatpush1.msra.mxu0 0.0
    %160 = vmatprep.subr.mxu0 0.0
    %161 = vmatpush1.msra.mxu0 0.0
    %162 = vmatprep.subr.mxu0 0.0
    %163 = vmatpush1.msra.mxu0 0.0
    %164 = vmatprep.subr.mxu0 0.0
    %165 = vmatpush1.msra.mxu0 0.0
    %166 = vmatprep.subr.mxu0 0.0
    %167 = vmatpush1.msra.mxu0 0.0
    %168 = vmatprep.subr.mxu0 0.0
    %169 = vmatpush1.msra.mxu0 0.0
    %170 = vmatprep.subr.mxu0 0.0
    %171 = vmatpush1.msra.mxu0 0.0
    %172 = vmatprep.subr.mxu0 0.0
    %173 = vmatpush1.msra.mxu0 0.0
    %174 = vmatprep.subr.mxu0 0.0
    %175 = vmatpush1.msra.mxu0 0.0
    %176 = vmatprep.subr.mxu0 0.0
    %177 = vmatpush1.msra.mxu0 0.0
    %178 = vmatprep.subr.mxu0 0.0
    %179 = vmatpush1.msra.mxu0 0.0
    %180 = vmatprep.subr.mxu0 0.0
    %181 = vmatpush1.msra.mxu0 0.0
    %182 = vmatprep.subr.mxu0 0.0
    %183 = vmatpush1.msra.mxu0 0.0
    %184 = vmatprep.mubr.f32.mxu0 0.0
    %185 = vmatmul.mubr.f32.gmra.mrb[0].mxu0 %v118
    %v186 = vpop.f32.mrb[0].mxu0
    %v187 = vadd.f32 %v113, %v186
    %v188 = vpop.f32.mrb[0].mxu0
    %189 = vdwg.mxu0
    %v190 = vld [vmem:[%s4] sm:$0x1]
    %v192 = vlaneseq
    %v193 = vshrl.u32 %v192, 7
    %v194 = vsub.s32 0, %v193
    %v195 = vrot.slane %v190, %v194
    %v197 = vadd.f32 %v187, %v195
    %v198 = vmax.f32 %v197, 0.0
    %v199 = vld [vmem:[%s5] sm:$0xff]
    %v200 = vld [vmem:[%s5 + $0x8] sm:$0xff]
    %v201 = vld [vmem:[%s5 + $0x10] sm:$0xff]
    %v202 = vld [vmem:[%s5 + $0x18] sm:$0xff]
    %v203 = vld [vmem:[%s5 + $0x20] sm:$0xff]
    %v204 = vld [vmem:[%s5 + $0x28] sm:$0xff]
    %v205 = vld [vmem:[%s5 + $0x30] sm:$0xff]
    %v206 = vld [vmem:[%s5 + $0x38] sm:$0xff]
    %v207 = vld [vmem:[%s7] sm:$0x1]
    %v209 = vlaneseq
    %v210 = vshrl.u32 %v209, 7
    %v211 = vsub.s32 0, %v210
    %v212 = vrot.slane %v207, %v211
    %vm214 = vcmask 523264
    %v216 = vsel %vm214, %v198, 0
    %218 = vmatprep.subr.mxu0 0.0
    %219 = vmatpush1.msra.mxu0 %v199
    %220 = vmatprep.subr.mxu0 0.0
    %221 = vmatpush1.msra.mxu0 %v200
    %222 = vmatprep.subr.mxu0 0.0
    %223 = vmatpush1.msra.mxu0 %v201
    %224 = vmatprep.subr.mxu0 0.0
    %225 = vmatpush1.msra.mxu0 %v202
    %226 = vmatprep.subr.mxu0 0.0
    %227 = vmatpush1.msra.mxu0 %v203
    %228 = vmatprep.subr.mxu0 0.0
    %229 = vmatpush1.msra.mxu0 %v204
    %230 = vmatprep.subr.mxu0 0.0
    %231 = vmatpush1.msra.mxu0 %v205
    %232 = vmatprep.subr.mxu0 0.0
    %233 = vmatpush1.msra.mxu0 %v206
    %234 = vmatprep.subr.mxu0 0.0
    %235 = vmatpush1.msra.mxu0 0.0
    %236 = vmatprep.subr.mxu0 0.0
    %237 = vmatpush1.msra.mxu0 0.0
    %238 = vmatprep.subr.mxu0 0.0
    %239 = vmatpush1.msra.mxu0 0.0
    %240 = vmatprep.subr.mxu0 0.0
    %241 = vmatpush1.msra.mxu0 0.0
    %242 = vmatprep.subr.mxu0 0.0
    %243 = vmatpush1.msra.mxu0 0.0
    %244 = vmatprep.subr.mxu0 0.0
    %245 = vmatpush1.msra.mxu0 0.0
    %246 = vmatprep.subr.mxu0 0.0
    %247 = vmatpush1.msra.mxu0 0.0
    %248 = vmatprep.subr.mxu0 0.0
    %249 = vmatpush1.msra.mxu0 0.0
    %250 = vmatprep.subr.mxu0 0.0
    %251 = vmatpush1.msra.mxu0 0.0
    %252 = vmatprep.subr.mxu0 0.0
    %253 = vmatpush1.msra.mxu0 0.0
    %254 = vmatprep.subr.mxu0 0.0
    %255 = vmatpush1.msra.mxu0 0.0
    %256 = vmatprep.subr.mxu0 0.0
    %257 = vmatpush1.msra.mxu0 0.0
    %258 = vmatprep.subr.mxu0 0.0
    %259 = vmatpush1.msra.mxu0 0.0
    %260 = vmatprep.subr.mxu0 0.0
    %261 = vmatpush1.msra.mxu0 0.0
    %262 = vmatprep.subr.mxu0 0.0
    %263 = vmatpush1.msra.mxu0 0.0
    %264 = vmatprep.subr.mxu0 0.0
    %265 = vmatpush1.msra.mxu0 0.0
    %266 = vmatprep.subr.mxu0 0.0
    %267 = vmatpush1.msra.mxu0 0.0
    %268 = vmatprep.subr.mxu0 0.0
    %269 = vmatpush1.msra.mxu0 0.0
    %270 = vmatprep.subr.mxu0 0.0
    %271 = vmatpush1.msra.mxu0 0.0
    %272 = vmatprep.subr.mxu0 0.0
    %273 = vmatpush1.msra.mxu0 0.0
    %274 = vmatprep.subr.mxu0 0.0
    %275 = vmatpush1.msra.mxu0 0.0
    %276 = vmatprep.subr.mxu0 0.0
    %277 = vmatpush1.msra.mxu0 0.0
    %278 = vmatprep.subr.mxu0 0.0
    %279 = vmatpush1.msra.mxu0 0.0
    %280 = vmatprep.subr.mxu0 0.0
    %281 = vmatpush1.msra.mxu0 0.0
    %282 = vmatprep.mubr.f32.mxu0 0.0
    %283 = vmatmul.mubr.f32.gmra.mrb[0].mxu0 %v216
    %v284 = vpop.f32.mrb[0].mxu0
    %v285 = vadd.f32 %v212, %v284
    %v286 = vpop.f32.mrb[0].mxu0
    %287 = vdwg.mxu0
    %v288 = vld [vmem:[%s6] sm:$0xff]
    %v289 = vld [vmem:[%s6 + $0x8] sm:$0xff]
    %v290 = vld [vmem:[%s6 + $0x10] sm:$0xff]
    %v291 = vld [vmem:[%s6 + $0x18] sm:$0xff]
    %v292 = vld [vmem:[%s6 + $0x20] sm:$0xff]
    %v293 = vld [vmem:[%s6 + $0x28] sm:$0xff]
    %v294 = vld [vmem:[%s6 + $0x30] sm:$0xff]
    %v295 = vld [vmem:[%s6 + $0x38] sm:$0xff]
    %v296 = vld [vmem:[%s8] sm:$0x1]
    %v298 = vlaneseq
    %v299 = vshrl.u32 %v298, 7
    %v300 = vsub.s32 0, %v299
    %v301 = vrot.slane %v296, %v300
    %303 = vmatprep.subr.mxu0 0.0
    %304 = vmatpush1.msra.mxu0 %v288
    %305 = vmatprep.subr.mxu0 0.0
    %306 = vmatpush1.msra.mxu0 %v289
    %307 = vmatprep.subr.mxu0 0.0
    %308 = vmatpush1.msra.mxu0 %v290
    %309 = vmatprep.subr.mxu0 0.0
    %310 = vmatpush1.msra.mxu0 %v291
    %311 = vmatprep.subr.mxu0 0.0
    %312 = vmatpush1.msra.mxu0 %v292
    %313 = vmatprep.subr.mxu0 0.0
    %314 = vmatpush1.msra.mxu0 %v293
    %315 = vmatprep.subr.mxu0 0.0
    %316 = vmatpush1.msra.mxu0 %v294
    %317 = vmatprep.subr.mxu0 0.0
    %318 = vmatpush1.msra.mxu0 %v295
    %319 = vmatprep.subr.mxu0 0.0
    %320 = vmatpush1.msra.mxu0 0.0
    %321 = vmatprep.subr.mxu0 0.0
    %322 = vmatpush1.msra.mxu0 0.0
    %323 = vmatprep.subr.mxu0 0.0
    %324 = vmatpush1.msra.mxu0 0.0
    %325 = vmatprep.subr.mxu0 0.0
    %326 = vmatpush1.msra.mxu0 0.0
    %327 = vmatprep.subr.mxu0 0.0
    %328 = vmatpush1.msra.mxu0 0.0
    %329 = vmatprep.subr.mxu0 0.0
    %330 = vmatpush1.msra.mxu0 0.0
    %331 = vmatprep.subr.mxu0 0.0
    %332 = vmatpush1.msra.mxu0 0.0
    %333 = vmatprep.subr.mxu0 0.0
    %334 = vmatpush1.msra.mxu0 0.0
    %335 = vmatprep.subr.mxu0 0.0
    %336 = vmatpush1.msra.mxu0 0.0
    %337 = vmatprep.subr.mxu0 0.0
    %338 = vmatpush1.msra.mxu0 0.0
    %339 = vmatprep.subr.mxu0 0.0
    %340 = vmatpush1.msra.mxu0 0.0
    %341 = vmatprep.subr.mxu0 0.0
    %342 = vmatpush1.msra.mxu0 0.0
    %343 = vmatprep.subr.mxu0 0.0
    %344 = vmatpush1.msra.mxu0 0.0
    %345 = vmatprep.subr.mxu0 0.0
    %346 = vmatpush1.msra.mxu0 0.0
    %347 = vmatprep.subr.mxu0 0.0
    %348 = vmatpush1.msra.mxu0 0.0
    %349 = vmatprep.subr.mxu0 0.0
    %350 = vmatpush1.msra.mxu0 0.0
    %351 = vmatprep.subr.mxu0 0.0
    %352 = vmatpush1.msra.mxu0 0.0
    %353 = vmatprep.subr.mxu0 0.0
    %354 = vmatpush1.msra.mxu0 0.0
    %355 = vmatprep.subr.mxu0 0.0
    %356 = vmatpush1.msra.mxu0 0.0
    %357 = vmatprep.subr.mxu0 0.0
    %358 = vmatpush1.msra.mxu0 0.0
    %359 = vmatprep.subr.mxu0 0.0
    %360 = vmatpush1.msra.mxu0 0.0
    %361 = vmatprep.subr.mxu0 0.0
    %362 = vmatpush1.msra.mxu0 0.0
    %363 = vmatprep.subr.mxu0 0.0
    %364 = vmatpush1.msra.mxu0 0.0
    %365 = vmatprep.subr.mxu0 0.0
    %366 = vmatpush1.msra.mxu0 0.0
    %367 = vmatprep.mubr.f32.mxu0 0.0
    %368 = vmatmul.mubr.f32.gmra.mrb[0].mxu0 %v216
    %v369 = vpop.f32.mrb[0].mxu0
    %v370 = vadd.f32 %v301, %v369
    %v371 = vpop.f32.mrb[0].mxu0
    %372 = vdwg.mxu0
    %v373 = vmax.f32 %v370, 0.0
    %v374 = vand.u32 2147483647, %v370
    %v375 = vsub.f32 0.0, %v374
    %v376 = vmul.f32 %v375, 1.442695
    %v377 = vpow.pop %v376
    %v378 = vadd.f32 %v377, 1.0
    %v379 = vlog2.pop %v378
    %v380 = vmul.f32 %v379, 0.6931472
    %v381 = vmul.f32 -0.5, %v377
    %v382 = vadd.f32 %v381, 1.0
    %v383 = vmul.f32 %v382, %v377
    %v384 = vand.u32 2147483647, %v377
    %vm385 = vcmp.lt.f32.partialorder %v384, 0.0004427343
    %v386 = vsel %vm385, %v383, %v380
    %v387 = vadd.f32 %v373, %v386
    %vm388 = vcmask 130048
    %389 = vst.msk [vmem:[#allocation2] sm:$0xff] %vm388, %v285
    %v390 = vadd.f32 %v387, 1e-06
    %391 = vst.msk [vmem:[#allocation4] sm:$0xff] %vm388, %v390
    // Predicated region
    $region38: #{c_encoder_forward.1} parent=1 // pred_check
      _
    $region39: #{c_encoder_forward.1} parent=1 // pred_check_branch
      %393 = sbr.rel (0) target = $region41
    $region40: #{c_encoder_forward.1} parent=1 // pred_region
      %s395 = ssub.s32 128, 128
      %396 = vsyncadd [#allocation3], %s395
      %s398 = sshll.u32 [#allocation2], 4
      %s399 = int_to_ptr.vmem [resolvable:$true] %s398
      %401 = dma.vmem_to_hbm [thread:$0]  %s399, 128, %s9, [#allocation3]
    $region41: #{c_encoder_forward.1} parent=1 // pred_fallthru
      _
    // Predicated region
    $region42: #{c_encoder_forward.1} parent=1 // pred_check
      _
    $region43: #{c_encoder_forward.1} parent=1 // pred_check_branch
      %403 = sbr.rel (0) target = $region45
    $region44: #{c_encoder_forward.1} parent=1 // pred_region
      %s405 = ssub.s32 128, 128
      %406 = vsyncadd [#allocation5], %s405
      %s408 = sshll.u32 [#allocation4], 4
      %s409 = int_to_ptr.vmem [resolvable:$true] %s408
      %411 = dma.vmem_to_hbm [thread:$0]  %s409, 128, %s10, [#allocation5]
    $region45: #{c_encoder_forward.1} parent=1 // pred_fallthru
      _
    // Predicated region
    $region46: #{c_encoder_forward.1} parent=1 // pred_check
      _
    $region47: #{c_encoder_forward.1} parent=1 // pred_check_branch
      %413 = sbr.rel (0) target = $region49
    $region48: #{c_encoder_forward.1} parent=1 // pred_region
      %414 = dma.done [#allocation3], 128
    $region49: #{c_encoder_forward.1} parent=1 // pred_fallthru
      _
    // Predicated region
    $region50: #{c_encoder_forward.1} parent=1 // pred_check
      _
    $region51: #{c_encoder_forward.1} parent=1 // pred_check_branch
      %416 = sbr.rel (0) target = $region53
    $region52: #{c_encoder_forward.1} parent=1 // pred_region
      %417 = dma.done [#allocation5], 128
    $region53: #{c_encoder_forward.1} parent=1 // pred_fallthru
      _
    %418 = vsyncpa [#allocation3], 1
    %419 = vsyncpa [#allocation5], 1

</llo_original>
